<compile_context>
chip_gen: v7x
topology: tpu7x:2x2x1
jax: 0.10.0
libtpu: 0.0.40
codegen_flags: <defaults>
</compile_context>

<pallas_src>
import functools

import jax
import jax.numpy as jnp
from jax import lax
from jax.experimental import pallas as pl
from jax.experimental.pallas import tpu as pltpu


def _gl_kernel(x_ref, w_ref, b_ref, m_ref, o_ref, *, W):
    """Fused depthwise 3x3 conv + bias + residual (residual folded into center tap).

    x_ref: (TR, HWp)  rows = (batch, channel), lanes = h*W+w (zero-padded to HWp)
    w_ref: (TR, 9)    per-row taps, dh-major / dw-minor; center tap has +1.0 folded in
    b_ref: (TR, 1)    per-row bias
    m_ref: (4, HWp)   f32 {0,1} validity masks: [left, right, top, bottom] sources
    o_ref: (TR, HWp)
    """
    f32 = jnp.float32
    x = x_ref[...].astype(f32)            # (TR, HWp)
    w = w_ref[...].astype(f32)            # (TR, 9)  -- loaded once, sliced from value
    b = b_ref[...].astype(f32)            # (TR, 1)
    m = m_ref[...]                        # (4, HWp)
    HWP = x.shape[1]

    m_left = m[0:1, :]                    # valid source for dw = -1  (w != 0)
    m_right = m[1:2, :]                   # valid source for dw = +1  (w != W-1)
    m_top = m[2:3, :]                     # valid source for dh = -1  (h != 0)
    m_bot = m[3:4, :]                     # valid source for dh = +1  (h != H-1)

    # Horizontal taps: lane rolls (XLU slot) with left/right zero padding folded in.
    x_l = pltpu.roll(x, shift=1, axis=1) * m_left              # tap[p] = x[p-1]
    x_r = pltpu.roll(x, shift=(HWP - 1) % HWP, axis=1) * m_right  # tap[p] = x[p+1]

    # Per-dh weighted row sums (per-row scalar weights broadcast along lanes).
    r_m1 = x_l * w[:, 0:1] + x * w[:, 1:2] + x_r * w[:, 2:3]    # dh = -1
    r_0 = x_l * w[:, 3:4] + x * w[:, 4:5] + x_r * w[:, 5:6]     # dh =  0 (center has +1)
    r_p1 = x_l * w[:, 6:7] + x * w[:, 7:8] + x_r * w[:, 8:9]    # dh = +1

    # Vertical shifts by +/- W lanes with top/bottom zero padding folded in.
    acc = (r_0
           + pltpu.roll(r_m1, shift=W % HWP, axis=1) * m_top
           + pltpu.roll(r_p1, shift=(HWP - W) % HWP, axis=1) * m_bot)

    o_ref[...] = (acc + b).astype(o_ref.dtype)


def make_gl_params(weight, bias, N, H, W):
    """One-time (per-module / per-shape) parameter & mask prep; keep out of hot path.

    weight: (C, 1, 3, 3) PyTorch depthwise layout; bias: (C,).
    Returns (w_rows (R,9), b_rows (R,1), masks (4, HWp)).
    """
    C = weight.shape[0]
    HW = H * W
    HWP = ((HW + 127) // 128) * 128

    w_taps = weight.reshape(C, 9).astype(jnp.float32)
    w_taps = w_taps.at[:, 4].add(1.0)                 # fold residual into center tap
    w_rows = jnp.tile(w_taps, (N, 1))                 # (R, 9)
    b_rows = jnp.tile(bias.astype(jnp.float32)[:, None], (N, 1))  # (R, 1)

    pos = jnp.arange(HWP, dtype=jnp.int32)
    col = pos % W                                     # wrapper-side, never in-kernel
    masks = jnp.stack([
        (col != 0),                                   # dw = -1 source valid
        (col != W - 1),                               # dw = +1 source valid
        (pos >= W),                                   # dh = -1 source valid
        (pos < (H - 1) * W),                          # dh = +1 source valid
    ]).astype(jnp.float32)                            # (4, HWP)
    return w_rows, b_rows, masks


def gl_forward(x_nchw, w_rows, b_rows, masks, *, block_budget_bytes=2 << 20):
    """GL forward: x + depthwise_conv3x3(x) + bias, row-tiled Pallas kernel."""
    N, C, H, W = x_nchw.shape
    R, HW = N * C, H * W
    HWP = masks.shape[1]

    # Free view: NCHW contiguous -> (row=(n,c), lane=h*W+w); pad lanes to mult of 128.
    x2d = x_nchw.reshape(R, HW)
    if HWP != HW:
        x2d = jnp.pad(x2d, ((0, 0), (0, HWP - HW)))

    # Row-tile size: keep one block <= ~2 MiB (f32) so double-buffered inputs/outputs
    # plus kernel temporaries fit v7x's 64 MiB VMEM; v5e/v6e tolerate the same choice.
    max_rows = max(8, ((block_budget_bytes // (HWP * 4)) // 8) * 8)
    TR = R if R <= max_rows else max_rows
    grid = (pl.cdiv(R, TR),)

    kernel = functools.partial(_gl_kernel, W=W)
    out2d = pl.pallas_call(
        kernel,
        out_shape=jax.ShapeDtypeStruct((R, HWP), x_nchw.dtype),
        grid_spec=pltpu.PrefetchScalarGridSpec(
            num_scalar_prefetch=0,
            grid=grid,
            in_specs=[
                pl.BlockSpec((TR, HWP), lambda i: (i, 0)),   # x rows
                pl.BlockSpec((TR, 9), lambda i: (i, 0)),     # per-row taps
                pl.BlockSpec((TR, 1), lambda i: (i, 0)),     # per-row bias
                pl.BlockSpec((4, HWP), lambda i: (0, 0)),    # masks: constant block, stays resident
            ],
            out_specs=pl.BlockSpec((TR, HWP), lambda i: (i, 0)),
        ),
        compiler_params=pltpu.CompilerParams(
            dimension_semantics=("parallel",)),              # shard row blocks across TCs (v7x)
    )(x2d, w_rows, b_rows, masks)

    if HWP != HW:
        out2d = out2d[:, :HW]
    return out2d.reshape(N, C, H, W)


def gl_reference(x_nchw, weight, bias):
    """Pure-JAX reference (lax depthwise conv) for correctness check."""
    C = x_nchw.shape[1]
    y = lax.conv_general_dilated(
        x_nchw, weight,
        window_strides=(1, 1), padding=((1, 1), (1, 1)),
        dimension_numbers=("NCHW", "OIHW", "NCHW"),
        feature_group_count=C)
    return x_nchw + y + bias[None, :, None, None]


if __name__ == "__main__":
    key = jax.random.PRNGKey(0)
    k_x, k_w, k_b = jax.random.split(key, 3)

    # Small shapes consistent with GL(dim=4) on a 16x16 feature map.
    N, C, H, W = 2, 4, 16, 16

    x = jax.random.normal(k_x, (N, C, H, W), dtype=jnp.float32)
    weight = 0.1 * jax.random.normal(k_w, (C, 1, 3, 3), dtype=jnp.float32)
    bias = 0.05 * jax.random.normal(k_b, (C,), dtype=jnp.float32)

    # Parameter / mask prep done once (hoisted out of the per-forward path).
    w_rows, b_rows, masks = make_gl_params(weight, bias, N, H, W)

    out = jax.block_until_ready(gl_forward(x, w_rows, b_rows, masks))

    ref = gl_reference(x, weight, bias)
    assert out.shape == (N, C, H, W)
    assert jnp.allclose(out, ref, atol=1e-5, rtol=1e-5), "mismatch vs reference"

    print("KERNEL_OK")
</pallas_src>

<mosaic_0001>
module attributes {stable_mosaic.version = 11 : i64} {
  func.func @_gl_kernel(%arg0: i32, %arg1: memref<8x256xf32, #tpu.memory_space<vmem>>, %arg2: memref<8x9xf32, #tpu.memory_space<vmem>>, %arg3: memref<8x1xf32, #tpu.memory_space<vmem>>, %arg4: memref<4x256xf32, #tpu.memory_space<vmem>>, %arg5: memref<8x256xf32, #tpu.memory_space<vmem>>) attributes {dimension_semantics = [#tpu.dimension_semantics<parallel>], iteration_bounds = array<i64: 1>, scalar_prefetch = 0 : i64, scratch_operands = 0 : i64, tpu.core_type = #tpu.core_type<tc>, window_params = [{transform_indices = @transform_0, window_bounds = array<i64: 8, 256>}, {transform_indices = @transform_1, window_bounds = array<i64: 8, 9>}, {transform_indices = @transform_2, window_bounds = array<i64: 8, 1>}, {pipeline_mode = #tpu.pipeline_mode<synchronous>, transform_indices = @transform_3, window_bounds = array<i64: 4, 256>}, {transform_indices = @transform_4, window_bounds = array<i64: 8, 256>}]} {
    %c0 = arith.constant 0 : index
    %c0_0 = arith.constant 0 : index
    %0 = vector.load %arg1[%c0, %c0_0] : memref<8x256xf32, #tpu.memory_space<vmem>>, vector<8x256xf32>
    %c0_1 = arith.constant 0 : index
    %c0_2 = arith.constant 0 : index
    %1 = vector.load %arg2[%c0_1, %c0_2] : memref<8x9xf32, #tpu.memory_space<vmem>>, vector<8x9xf32>
    %c0_3 = arith.constant 0 : index
    %c0_4 = arith.constant 0 : index
    %2 = vector.load %arg3[%c0_3, %c0_4] : memref<8x1xf32, #tpu.memory_space<vmem>>, vector<8x1xf32>
    %c0_5 = arith.constant 0 : index
    %c0_6 = arith.constant 0 : index
    %3 = vector.load %arg4[%c0_5, %c0_6] : memref<4x256xf32, #tpu.memory_space<vmem>>, vector<4x256xf32>
    %4 = vector.extract_strided_slice %3 {offsets = [0, 0], sizes = [1, 256], strides = [1, 1]} : vector<4x256xf32> to vector<1x256xf32>
    %5 = vector.extract_strided_slice %3 {offsets = [1, 0], sizes = [1, 256], strides = [1, 1]} : vector<4x256xf32> to vector<1x256xf32>
    %6 = vector.extract_strided_slice %3 {offsets = [2, 0], sizes = [1, 256], strides = [1, 1]} : vector<4x256xf32> to vector<1x256xf32>
    %7 = vector.extract_strided_slice %3 {offsets = [3, 0], sizes = [1, 256], strides = [1, 1]} : vector<4x256xf32> to vector<1x256xf32>
    %c1_i32 = arith.constant 1 : i32
    %8 = tpu.dynamic_rotate %0 by %c1_i32 dim 1 : vector<8x256xf32>, i32 -> vector<8x256xf32>
    %9 = vector.broadcast %4 : vector<1x256xf32> to vector<8x256xf32>
    %10 = arith.mulf %8, %9 : vector<8x256xf32>
    %c255_i32 = arith.constant 255 : i32
    %11 = tpu.dynamic_rotate %0 by %c255_i32 dim 1 : vector<8x256xf32>, i32 -> vector<8x256xf32>
    %12 = vector.broadcast %5 : vector<1x256xf32> to vector<8x256xf32>
    %13 = arith.mulf %11, %12 : vector<8x256xf32>
    %14 = vector.extract_strided_slice %1 {offsets = [0, 0], sizes = [8, 1], strides = [1, 1]} : vector<8x9xf32> to vector<8x1xf32>
    %15 = vector.broadcast %14 : vector<8x1xf32> to vector<8x256xf32>
    %16 = arith.mulf %10, %15 : vector<8x256xf32>
    %17 = vector.extract_strided_slice %1 {offsets = [0, 1], sizes = [8, 1], strides = [1, 1]} : vector<8x9xf32> to vector<8x1xf32>
    %18 = vector.broadcast %17 : vector<8x1xf32> to vector<8x256xf32>
    %19 = arith.mulf %0, %18 : vector<8x256xf32>
    %20 = arith.addf %16, %19 : vector<8x256xf32>
    %21 = vector.extract_strided_slice %1 {offsets = [0, 2], sizes = [8, 1], strides = [1, 1]} : vector<8x9xf32> to vector<8x1xf32>
    %22 = vector.broadcast %21 : vector<8x1xf32> to vector<8x256xf32>
    %23 = arith.mulf %13, %22 : vector<8x256xf32>
    %24 = arith.addf %20, %23 : vector<8x256xf32>
    %25 = vector.extract_strided_slice %1 {offsets = [0, 3], sizes = [8, 1], strides = [1, 1]} : vector<8x9xf32> to vector<8x1xf32>
    %26 = vector.broadcast %25 : vector<8x1xf32> to vector<8x256xf32>
    %27 = arith.mulf %10, %26 : vector<8x256xf32>
    %28 = vector.extract_strided_slice %1 {offsets = [0, 4], sizes = [8, 1], strides = [1, 1]} : vector<8x9xf32> to vector<8x1xf32>
    %29 = vector.broadcast %28 : vector<8x1xf32> to vector<8x256xf32>
    %30 = arith.mulf %0, %29 : vector<8x256xf32>
    %31 = arith.addf %27, %30 : vector<8x256xf32>
    %32 = vector.extract_strided_slice %1 {offsets = [0, 5], sizes = [8, 1], strides = [1, 1]} : vector<8x9xf32> to vector<8x1xf32>
    %33 = vector.broadcast %32 : vector<8x1xf32> to vector<8x256xf32>
    %34 = arith.mulf %13, %33 : vector<8x256xf32>
    %35 = arith.addf %31, %34 : vector<8x256xf32>
    %36 = vector.extract_strided_slice %1 {offsets = [0, 6], sizes = [8, 1], strides = [1, 1]} : vector<8x9xf32> to vector<8x1xf32>
    %37 = vector.broadcast %36 : vector<8x1xf32> to vector<8x256xf32>
    %38 = arith.mulf %10, %37 : vector<8x256xf32>
    %39 = vector.extract_strided_slice %1 {offsets = [0, 7], sizes = [8, 1], strides = [1, 1]} : vector<8x9xf32> to vector<8x1xf32>
    %40 = vector.broadcast %39 : vector<8x1xf32> to vector<8x256xf32>
    %41 = arith.mulf %0, %40 : vector<8x256xf32>
    %42 = arith.addf %38, %41 : vector<8x256xf32>
    %43 = vector.extract_strided_slice %1 {offsets = [0, 8], sizes = [8, 1], strides = [1, 1]} : vector<8x9xf32> to vector<8x1xf32>
    %44 = vector.broadcast %43 : vector<8x1xf32> to vector<8x256xf32>
    %45 = arith.mulf %13, %44 : vector<8x256xf32>
    %46 = arith.addf %42, %45 : vector<8x256xf32>
    %c16_i32 = arith.constant 16 : i32
    %47 = tpu.dynamic_rotate %24 by %c16_i32 dim 1 : vector<8x256xf32>, i32 -> vector<8x256xf32>
    %48 = vector.broadcast %6 : vector<1x256xf32> to vector<8x256xf32>
    %49 = arith.mulf %47, %48 : vector<8x256xf32>
    %50 = arith.addf %35, %49 : vector<8x256xf32>
    %c240_i32 = arith.constant 240 : i32
    %51 = tpu.dynamic_rotate %46 by %c240_i32 dim 1 : vector<8x256xf32>, i32 -> vector<8x256xf32>
    %52 = vector.broadcast %7 : vector<1x256xf32> to vector<8x256xf32>
    %53 = arith.mulf %51, %52 : vector<8x256xf32>
    %54 = arith.addf %50, %53 : vector<8x256xf32>
    %55 = vector.broadcast %2 : vector<8x1xf32> to vector<8x256xf32>
    %56 = arith.addf %54, %55 : vector<8x256xf32>
    %c0_7 = arith.constant 0 : index
    %c0_8 = arith.constant 0 : index
    %57 = vector.load %arg5[%c0_7, %c0_8] : memref<8x256xf32, #tpu.memory_space<vmem>>, vector<8x256xf32>
    tpu.vector_store %arg5[%c0_7, %c0_8], %56 {strides = array<i32>} : memref<8x256xf32, #tpu.memory_space<vmem>>, vector<8x256xf32>,
    return
  }
  func.func @transform_0(%arg0: i32) -> (i32, i32) {
    %c0_i32 = arith.constant 0 : i32
    %c0_i32_0 = arith.constant 0 : i32
    return %arg0, %c0_i32 : i32, i32
  }
  func.func @transform_1(%arg0: i32) -> (i32, i32) {
    %c0_i32 = arith.constant 0 : i32
    %c0_i32_0 = arith.constant 0 : i32
    return %arg0, %c0_i32 : i32, i32
  }
  func.func @transform_2(%arg0: i32) -> (i32, i32) {
    %c0_i32 = arith.constant 0 : i32
    %c0_i32_0 = arith.constant 0 : i32
    return %arg0, %c0_i32 : i32, i32
  }
  func.func @transform_3(%arg0: i32) -> (i32, i32) {
    %c0_i32 = arith.constant 0 : i32
    %c0_i32_0 = arith.constant 0 : i32
    %c0_i32_1 = arith.constant 0 : i32
    return %c0_i32, %c0_i32_0 : i32, i32
  }
  func.func @transform_4(%arg0: i32) -> (i32, i32) {
    %c0_i32 = arith.constant 0 : i32
    %c0_i32_0 = arith.constant 0 : i32
    return %arg0, %c0_i32 : i32, i32
  }
}

</mosaic_0001>

<llo_original>
// kernel: tpu_custom_call.1
$region0: #{tpu_custom_call.1}
  #allocation0 [shape = 'u32[]', space=smem, size = 0x4, offset = 0x4, fixed_abs, tag = 'smem constant byte address 0x4 - core index']
  #allocation1 [shape = 'u32[144,128]{1,0:T(1,128)}', space=vmem, size = 0x12000, scoped, tag = 'internal scratch']
  %s0 = inlined_call_operand.hbm [shape: f32[8,256], index: 0, kind: input, shape index: {}]
  %s1 = inlined_call_operand.vmem [shape: f32[8,9], index: 1, kind: input, shape index: {}]
  %s2 = inlined_call_operand.vmem [shape: f32[8,1], index: 2, kind: input, shape index: {}]
  %s3 = inlined_call_operand.vmem [shape: f32[4,256], index: 3, kind: input, shape index: {}]
  %s4 = inlined_call_operand.hbm [shape: f32[8,256], index: 4, kind: output, shape index: {}]
  %s5 = sld [smem:[#allocation0]]
  $region30: #{tpu_custom_call.1} parent=0
    _
  %s7 = ssub.s32 1, %s5
  %s8 = scalar_select 0, %s7, %s5
  $region1: #{tpu_custom_call.1} parent=0
    #allocation2 [shape = 'u8[8192]{0}', space=vmem, size = 0x2000, scoped, tag = 'input window, operand 0, single buffered']
    #allocation3 [shape = 's32[1]{0}', space=sflag, size = 0x4, scoped, tag = 'scoped memory for tpu_custom_call.1']
    #allocation4 [shape = 's32[1]{0}', space=sflag, size = 0x4, scoped, tag = 'scoped memory for tpu_custom_call.1']
    #allocation5 [shape = 'u8[8192]{0}', space=vmem, size = 0x2000, scoped, tag = 'output window, operand 0, single buffered']
    %9 = vsyncpa [#allocation3], 0
    %10 = vsyncpa [#allocation4], 0
    // Predicated region
    $region2: #{tpu_custom_call.1} parent=1 // pred_check
      _
    $region3: #{tpu_custom_call.1} parent=1 // pred_check_branch
      %12 = sbr.rel (0) target = $region5
    $region4: #{tpu_custom_call.1} parent=1 // pred_region
      %s14 = ssub.s32 256, 256
      %15 = vsyncadd [#allocation3], %s14
      %s17 = sshll.u32 [#allocation2], 4
      %s18 = int_to_ptr.vmem [resolvable:$true] %s17
      %20 = dma.hbm_to_vmem [thread:$0]  %s0, 256, %s18, [#allocation3]
    $region5: #{tpu_custom_call.1} parent=1 // pred_fallthru
      _
    // Predicated region
    $region6: #{tpu_custom_call.1} parent=1 // pred_check
      _
    $region7: #{tpu_custom_call.1} parent=1 // pred_check_branch
      %22 = sbr.rel (0) target = $region9
    $region8: #{tpu_custom_call.1} parent=1 // pred_region
      _
    $region9: #{tpu_custom_call.1} parent=1 // pred_fallthru
      _
    // Predicated region
    $region10: #{tpu_custom_call.1} parent=1 // pred_check
      _
    $region11: #{tpu_custom_call.1} parent=1 // pred_check_branch
      %24 = sbr.rel (0) target = $region13
    $region12: #{tpu_custom_call.1} parent=1 // pred_region
      _
    $region13: #{tpu_custom_call.1} parent=1 // pred_fallthru
      _
    // Predicated region
    $region14: #{tpu_custom_call.1} parent=1 // pred_check
      _
    $region15: #{tpu_custom_call.1} parent=1 // pred_check_branch
      %26 = sbr.rel (0) target = $region17
    $region16: #{tpu_custom_call.1} parent=1 // pred_region
      _
    $region17: #{tpu_custom_call.1} parent=1 // pred_fallthru
      _
    // Predicated region
    $region18: #{tpu_custom_call.1} parent=1 // pred_check
      _
    $region19: #{tpu_custom_call.1} parent=1 // pred_check_branch
      %28 = sbr.rel (0) target = $region21
    $region20: #{tpu_custom_call.1} parent=1 // pred_region
      %29 = dma.done [#allocation3], 256
    $region21: #{tpu_custom_call.1} parent=1 // pred_fallthru
      _
    %v30 = vld [vmem:[#allocation2] sm:$0xff]
    %v31 = vld [vmem:[#allocation2 + $0x8] sm:$0xff]
    %v32 = vld [vmem:[%s1] sm:$0xff]
    %v33 = vld [vmem:[%s2] sm:$0xff]
    %v34 = vld [vmem:[%s3] sm:$0xff]
    %35 = vrot.lane.b32.xlu0 %v30, 1
    %v36 = vpop.permute.xlu0 %35
    %37 = vrot.lane.b32.xlu0 %v31, 1
    %v38 = vpop.permute.xlu0 %37
    %v39 = vlaneseq
    %v40 = vand.u32 %v39, 127
    %vm41 = vcmp.lt.s32.totalorder %v40, 1
    %v42 = vsel %vm41, %v36, %v38
    %v43 = vsel %vm41, %v38, %v36
    %v45 = vlaneseq
    %v46 = vshrl.u32 %v45, 7
    %v47 = vsub.s32 0, %v46
    %v48 = vrot.slane %v34, %v47
    %v49 = vlaneseq
    %v50 = vshrl.u32 %v49, 7
    %v51 = vsub.s32 4, %v50
    %v52 = vrot.slane %v34, %v51
    %v55 = vlaneseq
    %v56 = vshrl.u32 %v55, 7
    %v57 = vsub.s32 0, %v56
    %v58 = vrot.slane %v48, %v57
    %v59 = vlaneseq
    %v60 = vshrl.u32 %v59, 7
    %v61 = vsub.s32 0, %v60
    %v62 = vrot.slane %v52, %v61
    %v63 = vmul.f32 %v43, %v58
    %v64 = vmul.f32 %v42, %v62
    %65 = vrot.lane.b32.xlu0 %v30, 127
    %v66 = vpop.permute.xlu0 %65
    %67 = vrot.lane.b32.xlu0 %v31, 127
    %v68 = vpop.permute.xlu0 %67
    %vm69 = vcmp.lt.s32.totalorder %v40, 127
    %v70 = vsel %vm69, %v66, %v68
    %v71 = vsel %vm69, %v68, %v66
    %v72 = vlaneseq
    %v73 = vshrl.u32 %v72, 7
    %v74 = vsub.s32 1, %v73
    %v75 = vrot.slane %v34, %v74
    %v76 = vlaneseq
    %v77 = vshrl.u32 %v76, 7
    %v78 = vsub.s32 5, %v77
    %v79 = vrot.slane %v34, %v78
    %v82 = vlaneseq
    %v83 = vshrl.u32 %v82, 7
    %v84 = vsub.s32 1, %v83
    %v85 = vrot.slane %v75, %v84
    %v86 = vlaneseq
    %v87 = vshrl.u32 %v86, 7
    %v88 = vsub.s32 1, %v87
    %v89 = vrot.slane %v79, %v88
    %v90 = vmul.f32 %v70, %v85
    %v91 = vmul.f32 %v71, %v89
    %93 = vset.pattern.permute.xlu0 0
    %94 = vperm.xlu0 %93, %v32
    %v95 = vpop.permute.xlu0 %94
    %v97 = vmul.f32 %v63, %v95
    %v98 = vmul.f32 %v64, %v95
    %99 = vset.pattern.permute.xlu0 1
    %100 = vperm.xlu0 %99, %v32
    %v101 = vpop.permute.xlu0 %100
    %v103 = vmul.f32 %v30, %v101
    %v104 = vmul.f32 %v31, %v101
    %v105 = vadd.f32 %v97, %v103
    %v106 = vadd.f32 %v98, %v104
    %107 = vset.pattern.permute.xlu0 2
    %108 = vperm.xlu0 %107, %v32
    %v109 = vpop.permute.xlu0 %108
    %v111 = vmul.f32 %v90, %v109
    %v112 = vmul.f32 %v91, %v109
    %v113 = vadd.f32 %v105, %v111
    %v114 = vadd.f32 %v106, %v112
    %115 = vset.pattern.permute.xlu0 3
    %116 = vperm.xlu0 %115, %v32
    %v117 = vpop.permute.xlu0 %116
    %v119 = vmul.f32 %v63, %v117
    %v120 = vmul.f32 %v64, %v117
    %121 = vset.pattern.permute.xlu0 4
    %122 = vperm.xlu0 %121, %v32
    %v123 = vpop.permute.xlu0 %122
    %v125 = vmul.f32 %v30, %v123
    %v126 = vmul.f32 %v31, %v123
    %v127 = vadd.f32 %v119, %v125
    %v128 = vadd.f32 %v120, %v126
    %129 = vset.pattern.permute.xlu0 5
    %130 = vperm.xlu0 %129, %v32
    %v131 = vpop.permute.xlu0 %130
    %v133 = vmul.f32 %v90, %v131
    %v134 = vmul.f32 %v91, %v131
    %v135 = vadd.f32 %v127, %v133
    %v136 = vadd.f32 %v128, %v134
    %137 = vset.pattern.permute.xlu0 6
    %138 = vperm.xlu0 %137, %v32
    %v139 = vpop.permute.xlu0 %138
    %v141 = vmul.f32 %v63, %v139
    %v142 = vmul.f32 %v64, %v139
    %143 = vset.pattern.permute.xlu0 7
    %144 = vperm.xlu0 %143, %v32
    %v145 = vpop.permute.xlu0 %144
    %v147 = vmul.f32 %v30, %v145
    %v148 = vmul.f32 %v31, %v145
    %v149 = vadd.f32 %v141, %v147
    %v150 = vadd.f32 %v142, %v148
    %151 = vset.pattern.permute.xlu0 8
    %152 = vperm.xlu0 %151, %v32
    %v153 = vpop.permute.xlu0 %152
    %v155 = vmul.f32 %v90, %v153
    %v156 = vmul.f32 %v91, %v153
    %v157 = vadd.f32 %v149, %v155
    %v158 = vadd.f32 %v150, %v156
    %159 = vrot.lane.b32.xlu0 %v113, 16
    %v160 = vpop.permute.xlu0 %159
    %161 = vrot.lane.b32.xlu0 %v114, 16
    %v162 = vpop.permute.xlu0 %161
    %vm163 = vcmp.lt.s32.totalorder %v40, 16
    %v164 = vsel %vm163, %v160, %v162
    %v165 = vsel %vm163, %v162, %v160
    %v166 = vlaneseq
    %v167 = vshrl.u32 %v166, 7
    %v168 = vsub.s32 2, %v167
    %v169 = vrot.slane %v34, %v168
    %v170 = vlaneseq
    %v171 = vshrl.u32 %v170, 7
    %v172 = vsub.s32 6, %v171
    %v173 = vrot.slane %v34, %v172
    %v176 = vlaneseq
    %v177 = vshrl.u32 %v176, 7
    %v178 = vsub.s32 2, %v177
    %v179 = vrot.slane %v169, %v178
    %v180 = vlaneseq
    %v181 = vshrl.u32 %v180, 7
    %v182 = vsub.s32 2, %v181
    %v183 = vrot.slane %v173, %v182
    %v184 = vmul.f32 %v165, %v179
    %v185 = vmul.f32 %v164, %v183
    %v186 = vadd.f32 %v135, %v184
    %v187 = vadd.f32 %v136, %v185
    %188 = vrot.lane.b32.xlu0 %v157, 112
    %v189 = vpop.permute.xlu0 %188
    %190 = vrot.lane.b32.xlu0 %v158, 112
    %v191 = vpop.permute.xlu0 %190
    %vm192 = vcmp.lt.s32.totalorder %v40, 112
    %v193 = vsel %vm192, %v189, %v191
    %v194 = vsel %vm192, %v191, %v189
    %v195 = vlaneseq
    %v196 = vshrl.u32 %v195, 7
    %v197 = vsub.s32 3, %v196
    %v198 = vrot.slane %v34, %v197
    %v199 = vlaneseq
    %v200 = vshrl.u32 %v199, 7
    %v201 = vsub.s32 7, %v200
    %v202 = vrot.slane %v34, %v201
    %v205 = vlaneseq
    %v206 = vshrl.u32 %v205, 7
    %v207 = vsub.s32 3, %v206
    %v208 = vrot.slane %v198, %v207
    %v209 = vlaneseq
    %v210 = vshrl.u32 %v209, 7
    %v211 = vsub.s32 3, %v210
    %v212 = vrot.slane %v202, %v211
    %v213 = vmul.f32 %v193, %v208
    %v214 = vmul.f32 %v194, %v212
    %v215 = vadd.f32 %v186, %v213
    %v216 = vadd.f32 %v187, %v214
    %218 = vset.pattern.permute.xlu0 0
    %219 = vperm.xlu0 %218, %v33
    %v220 = vpop.permute.xlu0 %219
    %v222 = vadd.f32 %v215, %v220
    %v223 = vadd.f32 %v216, %v220
    %224 = vst [vmem:[#allocation5] sm:$0xff] %v222
    %225 = vst [vmem:[#allocation5 + $0x8] sm:$0xff] %v223
    // Predicated region
    $region22: #{tpu_custom_call.1} parent=1 // pred_check
      _
    $region23: #{tpu_custom_call.1} parent=1 // pred_check_branch
      %227 = sbr.rel (0) target = $region25
    $region24: #{tpu_custom_call.1} parent=1 // pred_region
      %s229 = ssub.s32 256, 256
      %230 = vsyncadd [#allocation4], %s229
      %s232 = sshll.u32 [#allocation5], 4
      %s233 = int_to_ptr.vmem [resolvable:$true] %s232
      %235 = dma.vmem_to_hbm [thread:$0]  %s233, 256, %s4, [#allocation4]
    $region25: #{tpu_custom_call.1} parent=1 // pred_fallthru
      _
    // Predicated region
    $region26: #{tpu_custom_call.1} parent=1 // pred_check
      _
    $region27: #{tpu_custom_call.1} parent=1 // pred_check_branch
      %237 = sbr.rel (0) target = $region29
    $region28: #{tpu_custom_call.1} parent=1 // pred_region
      %238 = dma.done [#allocation4], 256
    $region29: #{tpu_custom_call.1} parent=1 // pred_fallthru
      _
    %239 = vsyncpa [#allocation3], 1
    %240 = vsyncpa [#allocation4], 1

</llo_original>
